<compile_context>
chip_gen: v5e
topology: v5e:2x2
jax: 0.10.0
libtpu: 0.0.40
codegen_flags: <defaults>
</compile_context>

<pallas_src>
import jax
import jax.numpy as jnp
from jax.experimental import pallas as pl
from jax.experimental.pallas import tpu as pltpu


# Sublane packing of the second-to-last block dim, by element size.
_SUBLANE_PACK = {4: 8, 2: 16, 1: 32}


def _chip_info():
    """(physical VMEM bytes, tensorcores per chip) with safe fallbacks."""
    vmem = 128 << 20
    cores = 0
    try:
        info = pltpu.get_tpu_info()
        vmem = int(getattr(info, "vmem_capacity_bytes", vmem))
        cores = int(getattr(info, "num_cores", 0) or 0)
    except Exception:
        pass
    if cores <= 0:
        # Heuristic: 64 MiB-VMEM chips (v7x-class) carry 2 TensorCores/chip.
        cores = 2 if vmem <= (64 << 20) else 1
    return vmem, cores


def _footprint_bytes(tb, tt, D, itemsize):
    """Approximate scoped-VMEM footprint for one pipelined grid step."""
    x_tile = tb * tt * D * itemsize          # native-dtype x tile
    out_tile = tb * D * itemsize
    f32_tmps = 2 * tb * tt * D * 4           # x*w and p*x full-tile f32 temps
    scratch = tb * (D + 2) * 4               # acc + running max + running denom
    return (2 * x_tile + 2 * out_tile        # double-buffered input / output
            + f32_tmps + scratch + D * 4 + (2 << 20))


def _vmem_limit_bytes(tb, tt, D, itemsize):
    phys, _ = _chip_info()
    need = _footprint_bytes(tb, tt, D, itemsize)
    return int(min(max(need, 8 << 20), max(phys - (8 << 20), 16 << 20)))


def _plan_tiling(B, T, D, itemsize):
    """Pick (tb, tt): sublane-aligned batch tile + sequence tile, sized from a
    generation-aware VMEM budget, with an even batch grid on dual-TC chips."""
    pack = _SUBLANE_PACK.get(itemsize, 8)
    phys, cores = _chip_info()
    budget = max(min(phys - (16 << 20), 100 << 20), 24 << 20)
    x_tile_cap = (10 << 20) if phys <= (64 << 20) else (16 << 20)

    def cands(n):
        ds = [d for d in range(1, n + 1) if n % d == 0 and d % pack == 0]
        if n not in ds:
            ds.append(n)                     # full-extent block is always legal
        return sorted(set(ds), reverse=True)

    tb_cands, tt_cands = cands(B), cands(T)

    def fits(tb, tt):
        return (tb * tt * D * itemsize <= x_tile_cap
                and _footprint_bytes(tb, tt, D, itemsize) <= budget)

    tb = tt = None
    for tt_try in tt_cands:                  # prefer the whole sequence / step
        ok = [c for c in tb_cands if fits(c, tt_try)]
        if not ok:
            continue
        tt, tb = tt_try, ok[0]
        if cores > 1:
            # Balance the TensorCores: prefer an even (>=4 if possible) number
            # of steps along the "parallel" batch axis.
            steps = B // tb
            even4 = [c for c in ok if (B // c) % 2 == 0 and (B // c) >= 4]
            even2 = [c for c in ok if (B // c) % 2 == 0]
            if steps % 2 != 0 or steps < 4:
                if even4:
                    tb = even4[0]
                elif even2 and steps % 2 != 0:
                    tb = even2[0]
        break
    if tb is None:
        # Even the smallest aligned tile misses the soft budget; take it and
        # let vmem_limit_bytes grow toward physical VMEM.
        tb, tt = tb_cands[-1], tt_cands[-1]
    return tb, tt


def _simple_attention_kernel(x_ref, w_ref, b_ref, o_ref, m_sc, l_sc, acc_sc):
    # x_ref : (tb, tt, D) block (native dtype)
    # w_ref : (1, D)      projection weight (VMEM, resident across the grid)
    # b_ref : (1, 1)      projection bias (SMEM scalar)
    # o_ref : (tb, D)     output block (resident across the T axis)
    # m_sc  : (tb, 1) f32 running max          (online softmax)
    # l_sc  : (tb, 1) f32 running denominator
    # acc_sc: (tb, D) f32 running weighted sum
    t = pl.program_id(1)
    nt = pl.num_programs(1)

    @pl.when(t == 0)
    def _():
        m_sc[...] = jnp.full(m_sc.shape, -jnp.inf, jnp.float32)
        l_sc[...] = jnp.zeros(l_sc.shape, jnp.float32)
        acc_sc[...] = jnp.zeros(acc_sc.shape, jnp.float32)

    x = x_ref[...]                                   # (tb, tt, D) native dtype
    w = w_ref[...].astype(jnp.float32)               # (1, D)
    b = b_ref[0, 0].astype(jnp.float32)              # scalar

    # proj(x).squeeze(-1): VPU multiply + lane reduce over D, f32 accumulate.
    # Lane-dense (tb, tt) layout for the whole softmax path.
    s = jnp.sum(x * w, axis=-1) + b                  # (tb, tt) f32

    # Online softmax over the sequence axis.
    m_prev = m_sc[...]                                            # (tb, 1)
    m_new = jnp.maximum(m_prev, jnp.max(s, axis=-1, keepdims=True))
    alpha = jnp.exp(m_prev - m_new)                               # (tb, 1)
    p = jnp.exp(s - m_new)                                        # (tb, tt)
    l_sc[...] = alpha * l_sc[...] + jnp.sum(p, axis=-1, keepdims=True)

    # Weighted sum over this sequence block: VPU multiply + sublane reduce.
    part = jnp.sum(p[..., None] * x, axis=1)                      # (tb, D) f32
    acc_sc[...] = alpha * acc_sc[...] + part
    m_sc[...] = m_new

    @pl.when(t == nt - 1)
    def _():
        # approx=True reciprocal routes to the EUP (~1e-3 rel on the denom).
        inv = pl.reciprocal(l_sc[...], approx=True)               # (tb, 1)
        o_ref[...] = (acc_sc[...] * inv).astype(o_ref.dtype)


def simple_attention(x, proj_weight, proj_bias, *, batch_block=None,
                     seq_block=None):
    """x: (B, T, D), proj_weight: (1, D), proj_bias: (1, 1) -> (B, D)."""
    B, T, D = x.shape
    itemsize = jnp.dtype(x.dtype).itemsize
    tb, tt = _plan_tiling(B, T, D, itemsize)
    if batch_block is not None:
        tb = batch_block
    if seq_block is not None:
        tt = seq_block
    assert B % tb == 0, f"batch_block {tb} must divide batch {B}"
    assert T % tt == 0, f"seq_block {tt} must divide sequence {T}"

    vmem_limit = _vmem_limit_bytes(tb, tt, D, itemsize)

    return pl.pallas_call(
        _simple_attention_kernel,
        out_shape=jax.ShapeDtypeStruct((B, D), x.dtype),
        grid_spec=pltpu.PrefetchScalarGridSpec(
            num_scalar_prefetch=0,
            grid=(B // tb, T // tt),
            in_specs=[
                pl.BlockSpec((tb, tt, D), lambda b, t: (b, t, 0)),    # x tile
                pl.BlockSpec((1, D), lambda b, t: (0, 0)),            # weight
                pl.BlockSpec(memory_space=pltpu.MemorySpace.SMEM),    # bias
            ],
            out_specs=pl.BlockSpec((tb, D), lambda b, t: (b, 0)),
            scratch_shapes=[
                pltpu.VMEM((tb, 1), jnp.float32),   # running max
                pltpu.VMEM((tb, 1), jnp.float32),   # running denominator
                pltpu.VMEM((tb, D), jnp.float32),   # running weighted sum
            ],
        ),
        compiler_params=pltpu.CompilerParams(
            # "parallel" on the batch axis is the documented megacore / dual-TC
            # sharding mechanism; the T axis is a reduction -> "arbitrary".
            dimension_semantics=("parallel", "arbitrary"),
            vmem_limit_bytes=vmem_limit,
        ),
    )(x, proj_weight, proj_bias)


def simple_attention_ref(x, proj_weight, proj_bias):
    """Pure-JAX reference mirroring the PyTorch forward."""
    scores = jnp.einsum("btd,od->bto", x, proj_weight) + proj_bias[0]  # (B,T,1)
    w = jax.nn.softmax(scores[..., 0], axis=1)                         # (B,T)
    return jnp.sum(w[..., None] * x, axis=1)                           # (B,D)


if __name__ == "__main__":
    key = jax.random.PRNGKey(0)
    kx, kw, kb, kx2 = jax.random.split(key, 4)

    # Small demo shapes: batch=16, seq=8, hidden dim=32 (nn.Linear(dim, 1)).
    B, T, D = 16, 8, 32
    x = jax.random.normal(kx, (B, T, D), dtype=jnp.float32)
    bound = 1.0 / (D ** 0.5)
    proj_weight = jax.random.uniform(kw, (1, D), jnp.float32, -bound, bound)
    proj_bias = jax.random.uniform(kb, (1, 1), jnp.float32, -bound, bound)

    out = jax.block_until_ready(simple_attention(x, proj_weight, proj_bias))
    ref = simple_attention_ref(x, proj_weight, proj_bias)
    assert out.shape == (B, D)
    # approx=True reciprocal trades ~1e-3 rel on the softmax denominator.
    assert jnp.allclose(out, ref, atol=2e-3, rtol=2e-3), "mismatch vs reference"

    # Also exercise the multi-step online-softmax path (T split into 4 blocks).
    B2, T2 = 8, 32
    x2 = jax.random.normal(kx2, (B2, T2, D), dtype=jnp.float32)
    out2 = jax.block_until_ready(
        simple_attention(x2, proj_weight, proj_bias, batch_block=8, seq_block=8))
    ref2 = simple_attention_ref(x2, proj_weight, proj_bias)
    assert jnp.allclose(out2, ref2, atol=2e-3, rtol=2e-3), \
        "mismatch (T-split online softmax) vs reference"

    print("KERNEL_OK")
</pallas_src>

<mosaic_0001>
module attributes {stable_mosaic.version = 11 : i64} {
  func.func @_simple_attention_kernel(%arg0: i32, %arg1: i32, %arg2: memref<16x8x32xf32, #tpu.memory_space<vmem>>, %arg3: memref<1x32xf32, #tpu.memory_space<vmem>>, %arg4: memref<1x1xf32, #tpu.memory_space<smem>>, %arg5: memref<16x32xf32, #tpu.memory_space<vmem>>, %arg6: memref<16x1xf32, #tpu.memory_space<vmem>>, %arg7: memref<16x1xf32, #tpu.memory_space<vmem>>, %arg8: memref<16x32xf32, #tpu.memory_space<vmem>>) attributes {dimension_semantics = [#tpu.dimension_semantics<parallel>, #tpu.dimension_semantics<arbitrary>], iteration_bounds = array<i64: 1, 1>, scalar_prefetch = 0 : i64, scratch_operands = 3 : i64, tpu.core_type = #tpu.core_type<tc>, window_params = [{transform_indices = @transform_0, window_bounds = array<i64: 16, 8, 32>}, {pipeline_mode = #tpu.pipeline_mode<synchronous>, transform_indices = @transform_1, window_bounds = array<i64: 1, 32>}, {transform_indices = @transform_2, window_bounds = array<i64: 1, 1>}, {transform_indices = @transform_3, window_bounds = array<i64: 16, 32>}]} {
    %c0_i32 = arith.constant 0 : i32
    %0 = arith.cmpi eq, %arg1, %c0_i32 : i32
    %1 = arith.extui %0 : i1 to i32
    %c0_i32_0 = arith.constant 0 : i32
    %2 = arith.cmpi ne, %1, %c0_i32_0 : i32
    scf.if %2 {
      %cst_24 = arith.constant 0xFF800000 : f32
      %40 = vector.broadcast %cst_24 : f32 to vector<16x1xf32>
      %c0_25 = arith.constant 0 : index
      %c0_26 = arith.constant 0 : index
      %41 = vector.load %arg6[%c0_25, %c0_26] : memref<16x1xf32, #tpu.memory_space<vmem>>, vector<16x1xf32>
      tpu.vector_store %arg6[%c0_25, %c0_26], %40 {strides = array<i32>} : memref<16x1xf32, #tpu.memory_space<vmem>>, vector<16x1xf32>,
      %cst_27 = arith.constant 0.000000e+00 : f32
      %42 = vector.broadcast %cst_27 : f32 to vector<16x1xf32>
      %c0_28 = arith.constant 0 : index
      %c0_29 = arith.constant 0 : index
      %43 = vector.load %arg7[%c0_28, %c0_29] : memref<16x1xf32, #tpu.memory_space<vmem>>, vector<16x1xf32>
      tpu.vector_store %arg7[%c0_28, %c0_29], %42 {strides = array<i32>} : memref<16x1xf32, #tpu.memory_space<vmem>>, vector<16x1xf32>,
      %cst_30 = arith.constant 0.000000e+00 : f32
      %44 = vector.broadcast %cst_30 : f32 to vector<16x32xf32>
      %c0_31 = arith.constant 0 : index
      %c0_32 = arith.constant 0 : index
      %45 = vector.load %arg8[%c0_31, %c0_32] : memref<16x32xf32, #tpu.memory_space<vmem>>, vector<16x32xf32>
      tpu.vector_store %arg8[%c0_31, %c0_32], %44 {strides = array<i32>} : memref<16x32xf32, #tpu.memory_space<vmem>>, vector<16x32xf32>,
    } else {
    }
    %c0 = arith.constant 0 : index
    %c0_1 = arith.constant 0 : index
    %c0_2 = arith.constant 0 : index
    %3 = vector.load %arg2[%c0, %c0_1, %c0_2] : memref<16x8x32xf32, #tpu.memory_space<vmem>>, vector<16x8x32xf32>
    %c0_3 = arith.constant 0 : index
    %c0_4 = arith.constant 0 : index
    %4 = vector.load %arg3[%c0_3, %c0_4] : memref<1x32xf32, #tpu.memory_space<vmem>>, vector<1x32xf32>
    %c0_5 = arith.constant 0 : index
    %c0_6 = arith.constant 0 : index
    %5 = memref.load %arg4[%c0_5, %c0_6] : memref<1x1xf32, #tpu.memory_space<smem>>
    %6 = vector.shape_cast %4 : vector<1x32xf32> to vector<1x1x32xf32>
    %7 = vector.broadcast %6 : vector<1x1x32xf32> to vector<16x8x32xf32>
    %8 = arith.mulf %3, %7 : vector<16x8x32xf32>
    %cst = arith.constant dense<0.000000e+00> : vector<16x8xf32>
    %9 = vector.multi_reduction <add>, %8, %cst [2] : vector<16x8x32xf32> to vector<16x8xf32>
    %10 = vector.broadcast %5 : f32 to vector<16x8xf32>
    %11 = arith.addf %9, %10 : vector<16x8xf32>
    %c0_7 = arith.constant 0 : index
    %c0_8 = arith.constant 0 : index
    %12 = vector.load %arg6[%c0_7, %c0_8] : memref<16x1xf32, #tpu.memory_space<vmem>>, vector<16x1xf32>
    %cst_9 = arith.constant dense<0xFF800000> : vector<16xf32>
    %13 = vector.multi_reduction <maximumf>, %11, %cst_9 [1] : vector<16x8xf32> to vector<16xf32>
    %14 = vector.shape_cast %13 : vector<16xf32> to vector<16x1xf32>
    %15 = arith.maximumf %12, %14 : vector<16x1xf32>
    %16 = arith.subf %12, %15 : vector<16x1xf32>
    %17 = math.exp %16 : vector<16x1xf32>
    %18 = vector.broadcast %15 : vector<16x1xf32> to vector<16x8xf32>
    %19 = arith.subf %11, %18 : vector<16x8xf32>
    %20 = math.exp %19 : vector<16x8xf32>
    %c0_10 = arith.constant 0 : index
    %c0_11 = arith.constant 0 : index
    %21 = vector.load %arg7[%c0_10, %c0_11] : memref<16x1xf32, #tpu.memory_space<vmem>>, vector<16x1xf32>
    %22 = arith.mulf %17, %21 : vector<16x1xf32>
    %cst_12 = arith.constant dense<0.000000e+00> : vector<16xf32>
    %23 = vector.multi_reduction <add>, %20, %cst_12 [1] : vector<16x8xf32> to vector<16xf32>
    %24 = vector.shape_cast %23 : vector<16xf32> to vector<16x1xf32>
    %25 = arith.addf %22, %24 : vector<16x1xf32>
    %c0_13 = arith.constant 0 : index
    %c0_14 = arith.constant 0 : index
    %26 = vector.load %arg7[%c0_13, %c0_14] : memref<16x1xf32, #tpu.memory_space<vmem>>, vector<16x1xf32>
    tpu.vector_store %arg7[%c0_13, %c0_14], %25 {strides = array<i32>} : memref<16x1xf32, #tpu.memory_space<vmem>>, vector<16x1xf32>,
    %27 = vector.shape_cast %20 : vector<16x8xf32> to vector<16x8x1xf32>
    %28 = vector.broadcast %27 : vector<16x8x1xf32> to vector<16x8x32xf32>
    %29 = arith.mulf %28, %3 : vector<16x8x32xf32>
    %cst_15 = arith.constant dense<0.000000e+00> : vector<16x32xf32>
    %30 = vector.multi_reduction <add>, %29, %cst_15 [1] : vector<16x8x32xf32> to vector<16x32xf32>
    %c0_16 = arith.constant 0 : index
    %c0_17 = arith.constant 0 : index
    %31 = vector.load %arg8[%c0_16, %c0_17] : memref<16x32xf32, #tpu.memory_space<vmem>>, vector<16x32xf32>
    %32 = vector.broadcast %17 : vector<16x1xf32> to vector<16x32xf32>
    %33 = arith.mulf %32, %31 : vector<16x32xf32>
    %34 = arith.addf %33, %30 : vector<16x32xf32>
    %c0_18 = arith.constant 0 : index
    %c0_19 = arith.constant 0 : index
    %35 = vector.load %arg8[%c0_18, %c0_19] : memref<16x32xf32, #tpu.memory_space<vmem>>, vector<16x32xf32>
    tpu.vector_store %arg8[%c0_18, %c0_19], %34 {strides = array<i32>} : memref<16x32xf32, #tpu.memory_space<vmem>>, vector<16x32xf32>,
    %c0_20 = arith.constant 0 : index
    %c0_21 = arith.constant 0 : index
    %36 = vector.load %arg6[%c0_20, %c0_21] : memref<16x1xf32, #tpu.memory_space<vmem>>, vector<16x1xf32>
    tpu.vector_store %arg6[%c0_20, %c0_21], %15 {strides = array<i32>} : memref<16x1xf32, #tpu.memory_space<vmem>>, vector<16x1xf32>,
    %c0_i32_22 = arith.constant 0 : i32
    %37 = arith.cmpi eq, %arg1, %c0_i32_22 : i32
    %38 = arith.extui %37 : i1 to i32
    %c0_i32_23 = arith.constant 0 : i32
    %39 = arith.cmpi ne, %38, %c0_i32_23 : i32
    scf.if %39 {
      %c0_24 = arith.constant 0 : index
      %c0_25 = arith.constant 0 : index
      %40 = vector.load %arg7[%c0_24, %c0_25] : memref<16x1xf32, #tpu.memory_space<vmem>>, vector<16x1xf32>
      %41 = tpu.reciprocal %40 {approx = true} : vector<16x1xf32> -> vector<16x1xf32>
      %c0_26 = arith.constant 0 : index
      %c0_27 = arith.constant 0 : index
      %42 = vector.load %arg8[%c0_26, %c0_27] : memref<16x32xf32, #tpu.memory_space<vmem>>, vector<16x32xf32>
      %43 = vector.broadcast %41 : vector<16x1xf32> to vector<16x32xf32>
      %44 = arith.mulf %42, %43 : vector<16x32xf32>
      %c0_28 = arith.constant 0 : index
      %c0_29 = arith.constant 0 : index
      %45 = vector.load %arg5[%c0_28, %c0_29] : memref<16x32xf32, #tpu.memory_space<vmem>>, vector<16x32xf32>
      tpu.vector_store %arg5[%c0_28, %c0_29], %44 {strides = array<i32>} : memref<16x32xf32, #tpu.memory_space<vmem>>, vector<16x32xf32>,
    } else {
    }
    return
  }
  func.func @transform_0(%arg0: i32, %arg1: i32) -> (i32, i32, i32) {
    %c0_i32 = arith.constant 0 : i32
    %c0_i32_0 = arith.constant 0 : i32
    return %arg0, %arg1, %c0_i32 : i32, i32, i32
  }
  func.func @transform_1(%arg0: i32, %arg1: i32) -> (i32, i32) {
    %c0_i32 = arith.constant 0 : i32
    %c0_i32_0 = arith.constant 0 : i32
    %c0_i32_1 = arith.constant 0 : i32
    return %c0_i32, %c0_i32_0 : i32, i32
  }
  func.func @transform_2(%arg0: i32, %arg1: i32) -> (i32, i32) {
    %c0_i32 = arith.constant 0 : i32
    %c0_i32_0 = arith.constant 0 : i32
    %c0_i32_1 = arith.constant 0 : i32
    return %c0_i32, %c0_i32_0 : i32, i32
  }
  func.func @transform_3(%arg0: i32, %arg1: i32) -> (i32, i32) {
    %c0_i32 = arith.constant 0 : i32
    %c0_i32_0 = arith.constant 0 : i32
    return %arg0, %c0_i32 : i32, i32
  }
}

</mosaic_0001>

<llo_original>
// kernel: tpu_custom_call.1
$region0: #{tpu_custom_call.1}
  #allocation0 [shape = 'u32[]', space=smem, size = 0x4, offset = 0x4, fixed_abs, tag = 'smem constant byte address 0x4 - core index']
  #allocation1 [shape = 'u32[72,128]{1,0:T(1,128)}', space=vmem, size = 0x9000, scoped, tag = 'internal scratch']
  #allocation2 [shape = 'f32[16,1]{1,0:T(8,128)}', space=vmem, size = 0x2000, scoped, tag = 'scratch operand']
  #allocation3 [shape = 'f32[16,1]{1,0:T(8,128)}', space=vmem, size = 0x2000, scoped, tag = 'scratch operand']
  #allocation4 [shape = 'f32[16,32]{1,0:T(8,128)}', space=vmem, size = 0x2000, scoped, tag = 'scratch operand']
  #allocation5 [shape = 'f32[1,1]{1,0:T(1,128)S(6)}', space=smem, size = 0x200, scoped, tag = 'scoped memory for tpu_custom_call.1']
  %s0 = inlined_call_operand.hbm [shape: f32[16,8,32], index: 0, kind: input, shape index: {}]
  %s1 = inlined_call_operand.vmem [shape: f32[1,32], index: 1, kind: input, shape index: {}]
  %s2 = inlined_call_operand.<no memory space> [shape: f32[1,1], index: 2, kind: input, shape index: {}]
  %s3 = inlined_call_operand.hbm [shape: f32[16,32], index: 3, kind: output, shape index: {}]
  %s4 = sld [smem:[#allocation0]]
  $region34: #{tpu_custom_call.1} parent=0
    _
  %s6 = ssub.s32 1, %s4
  %s7 = scalar_select 0, %s6, %s4
  %8 = sst [smem:[#allocation5]] %s2
  $region1: #{tpu_custom_call.1} parent=0
    #allocation6 [shape = 'u8[65536]{0}', space=vmem, size = 0x10000, scoped, tag = 'input window, operand 0, single buffered']
    #allocation7 [shape = 's32[1]{0}', space=sflag, size = 0x4, scoped, tag = 'scoped memory for tpu_custom_call.1']
    #allocation8 [shape = 's32[1]{0}', space=sflag, size = 0x4, scoped, tag = 'scoped memory for tpu_custom_call.1']
    #allocation9 [shape = 'u8[8192]{0}', space=vmem, size = 0x2000, scoped, tag = 'output window, operand 0, single buffered']
    %9 = vsyncpa [#allocation7], 0
    %10 = vsyncpa [#allocation8], 0
    // Predicated region
    $region2: #{tpu_custom_call.1} parent=1 // pred_check
      _
    $region3: #{tpu_custom_call.1} parent=1 // pred_check_branch
      %12 = sbr.rel (0) target = $region5
    $region4: #{tpu_custom_call.1} parent=1 // pred_region
      %14 = vsyncadd [#allocation7], 0
      %s15 = sshll.u32 %s0, 4
      %s16 = int_to_ptr.hbm [resolvable:$true] %s15
      %s17 = sshll.u32 [#allocation6], 4
      %s18 = int_to_ptr.vmem [resolvable:$true] %s17
      %23 = dma.hbm_to_vmem [thread:$0]  %s16, 2048, %s18, [#allocation7], 128, 128, 8
    $region5: #{tpu_custom_call.1} parent=1 // pred_fallthru
      _
    // Predicated region
    $region6: #{tpu_custom_call.1} parent=1 // pred_check
      _
    $region7: #{tpu_custom_call.1} parent=1 // pred_check_branch
      %25 = sbr.rel (0) target = $region9
    $region8: #{tpu_custom_call.1} parent=1 // pred_region
      _
    $region9: #{tpu_custom_call.1} parent=1 // pred_fallthru
      _
    // Predicated region
    $region10: #{tpu_custom_call.1} parent=1 // pred_check
      _
    $region11: #{tpu_custom_call.1} parent=1 // pred_check_branch
      %27 = sbr.rel (0) target = $region13
    $region12: #{tpu_custom_call.1} parent=1 // pred_region
      _
    $region13: #{tpu_custom_call.1} parent=1 // pred_fallthru
      _
    // Predicated region
    $region14: #{tpu_custom_call.1} parent=1 // pred_check
      _
    $region15: #{tpu_custom_call.1} parent=1 // pred_check_branch
      %29 = sbr.rel (0) target = $region17
    $region16: #{tpu_custom_call.1} parent=1 // pred_region
      %31 = dma.done [#allocation7], 2048
    $region17: #{tpu_custom_call.1} parent=1 // pred_fallthru
      _
    %p32 = scmp.eq.s32.totalorder 0, 0
    // Predicated region
    $region18: #{tpu_custom_call.1} parent=1 // pred_check
      %p33 = pneg %p32
    $region19: #{tpu_custom_call.1} parent=1 // pred_check_branch
      %35 = sbr.rel (%p33) target = $region21
    $region20: #{tpu_custom_call.1} parent=1 // pred_region
      %vm36 = vcmask 7168
      %37 = vst.msk [vmem:[#allocation2] sm:$0xff] %vm36, -inf
      %38 = vst.msk [vmem:[#allocation2 + $0x8] sm:$0xff] %vm36, -inf
      %39 = vst.msk [vmem:[#allocation3] sm:$0xff] %vm36, 0.0
      %40 = vst.msk [vmem:[#allocation3 + $0x8] sm:$0xff] %vm36, 0.0
      %vm41 = vcmask 261120
      %42 = vst.msk [vmem:[#allocation4] sm:$0xff] %vm41, 0.0
      %43 = vst.msk [vmem:[#allocation4 + $0x8] sm:$0xff] %vm41, 0.0
    $region21: #{tpu_custom_call.1} parent=1 // pred_fallthru
      _
    %v44 = vld [vmem:[#allocation6] sm:$0xff]
    %v45 = vld [vmem:[#allocation6 + $0x8] sm:$0xff]
    %v46 = vld [vmem:[#allocation6 + $0x10] sm:$0xff]
    %v47 = vld [vmem:[#allocation6 + $0x18] sm:$0xff]
    %v48 = vld [vmem:[#allocation6 + $0x20] sm:$0xff]
    %v49 = vld [vmem:[#allocation6 + $0x28] sm:$0xff]
    %v50 = vld [vmem:[#allocation6 + $0x30] sm:$0xff]
    %v51 = vld [vmem:[#allocation6 + $0x38] sm:$0xff]
    %v52 = vld [vmem:[#allocation6 + $0x40] sm:$0xff]
    %v53 = vld [vmem:[#allocation6 + $0x48] sm:$0xff]
    %v54 = vld [vmem:[#allocation6 + $0x50] sm:$0xff]
    %v55 = vld [vmem:[#allocation6 + $0x58] sm:$0xff]
    %v56 = vld [vmem:[#allocation6 + $0x60] sm:$0xff]
    %v57 = vld [vmem:[#allocation6 + $0x68] sm:$0xff]
    %v58 = vld [vmem:[#allocation6 + $0x70] sm:$0xff]
    %v59 = vld [vmem:[#allocation6 + $0x78] sm:$0xff]
    %v60 = vld [vmem:[%s1] sm:$0x1]
    %s61 = sld [smem:[#allocation5]]
    %v63 = vperm.slane %v60, 0
    %v65 = vmul.f32 %v44, %v63
    %v66 = vmul.f32 %v45, %v63
    %v67 = vmul.f32 %v46, %v63
    %v68 = vmul.f32 %v47, %v63
    %v69 = vmul.f32 %v48, %v63
    %v70 = vmul.f32 %v49, %v63
    %v71 = vmul.f32 %v50, %v63
    %v72 = vmul.f32 %v51, %v63
    %v73 = vmul.f32 %v52, %v63
    %v74 = vmul.f32 %v53, %v63
    %v75 = vmul.f32 %v54, %v63
    %v76 = vmul.f32 %v55, %v63
    %v77 = vmul.f32 %v56, %v63
    %v78 = vmul.f32 %v57, %v63
    %v79 = vmul.f32 %v58, %v63
    %v80 = vmul.f32 %v59, %v63
    %vm81 = vcmask 261120
    %v82 = vsel %vm81, %v65, 0.0
    %83 = vadd.xlane.f32.xlu0 %v82
    %v84 = vpop.xlane.xlu0 %83
    %v85 = vsel %vm81, %v66, 0.0
    %86 = vadd.xlane.f32.xlu0 %v85
    %v87 = vpop.xlane.xlu0 %86
    %v88 = vsel %vm81, %v67, 0.0
    %89 = vadd.xlane.f32.xlu0 %v88
    %v90 = vpop.xlane.xlu0 %89
    %v91 = vsel %vm81, %v68, 0.0
    %92 = vadd.xlane.f32.xlu0 %v91
    %v93 = vpop.xlane.xlu0 %92
    %v94 = vsel %vm81, %v69, 0.0
    %95 = vadd.xlane.f32.xlu0 %v94
    %v96 = vpop.xlane.xlu0 %95
    %v97 = vsel %vm81, %v70, 0.0
    %98 = vadd.xlane.f32.xlu0 %v97
    %v99 = vpop.xlane.xlu0 %98
    %v100 = vsel %vm81, %v71, 0.0
    %101 = vadd.xlane.f32.xlu0 %v100
    %v102 = vpop.xlane.xlu0 %101
    %v103 = vsel %vm81, %v72, 0.0
    %104 = vadd.xlane.f32.xlu0 %v103
    %v105 = vpop.xlane.xlu0 %104
    %v106 = vsel %vm81, %v73, 0.0
    %107 = vadd.xlane.f32.xlu0 %v106
    %v108 = vpop.xlane.xlu0 %107
    %v109 = vsel %vm81, %v74, 0.0
    %110 = vadd.xlane.f32.xlu0 %v109
    %v111 = vpop.xlane.xlu0 %110
    %v112 = vsel %vm81, %v75, 0.0
    %113 = vadd.xlane.f32.xlu0 %v112
    %v114 = vpop.xlane.xlu0 %113
    %v115 = vsel %vm81, %v76, 0.0
    %116 = vadd.xlane.f32.xlu0 %v115
    %v117 = vpop.xlane.xlu0 %116
    %v118 = vsel %vm81, %v77, 0.0
    %119 = vadd.xlane.f32.xlu0 %v118
    %v120 = vpop.xlane.xlu0 %119
    %v121 = vsel %vm81, %v78, 0.0
    %122 = vadd.xlane.f32.xlu0 %v121
    %v123 = vpop.xlane.xlu0 %122
    %v124 = vsel %vm81, %v79, 0.0
    %125 = vadd.xlane.f32.xlu0 %v124
    %v126 = vpop.xlane.xlu0 %125
    %v127 = vsel %vm81, %v80, 0.0
    %128 = vadd.xlane.f32.xlu0 %v127
    %v129 = vpop.xlane.xlu0 %128
    %v130 = vstv %s61
    %v131 = vadd.f32 %v84, %v130
    %v132 = vadd.f32 %v87, %v130
    %v133 = vadd.f32 %v90, %v130
    %v134 = vadd.f32 %v93, %v130
    %v135 = vadd.f32 %v96, %v130
    %v136 = vadd.f32 %v99, %v130
    %v137 = vadd.f32 %v102, %v130
    %v138 = vadd.f32 %v105, %v130
    %v139 = vadd.f32 %v108, %v130
    %v140 = vadd.f32 %v111, %v130
    %v141 = vadd.f32 %v114, %v130
    %v142 = vadd.f32 %v117, %v130
    %v143 = vadd.f32 %v120, %v130
    %v144 = vadd.f32 %v123, %v130
    %v145 = vadd.f32 %v126, %v130
    %v146 = vadd.f32 %v129, %v130
    %v147 = vld [vmem:[#allocation2] sm:$0xff]
    %v148 = vld [vmem:[#allocation2 + $0x8] sm:$0xff]
    %v165 = vlaneseq
    %v166 = vand.u32 %v165, 127
    %v167 = vperm.slane %v131, %v166
    %v168 = vperm.slane %v132, %v166
    %v169 = vperm.slane %v133, %v166
    %v170 = vperm.slane %v134, %v166
    %v171 = vperm.slane %v135, %v166
    %v172 = vperm.slane %v136, %v166
    %v173 = vperm.slane %v137, %v166
    %v174 = vperm.slane %v138, %v166
    %v175 = vperm.slane %v139, %v166
    %v176 = vperm.slane %v140, %v166
    %v177 = vperm.slane %v141, %v166
    %v178 = vperm.slane %v142, %v166
    %v179 = vperm.slane %v143, %v166
    %v180 = vperm.slane %v144, %v166
    %v181 = vperm.slane %v145, %v166
    %v182 = vperm.slane %v146, %v166
    %vm183 = vcmask 1041409
    %v184 = vsel %vm183, %v168, %v167
    %vm185 = vcmask 1042434
    %v186 = vsel %vm185, %v169, %v184
    %vm187 = vcmask 1043459
    %v188 = vsel %vm187, %v170, %v186
    %vm189 = vcmask 1044484
    %v190 = vsel %vm189, %v171, %v188
    %vm191 = vcmask 1045509
    %v192 = vsel %vm191, %v172, %v190
    %vm193 = vcmask 1046534
    %v194 = vsel %vm193, %v173, %v192
    %vm195 = vcmask 1047559
    %v196 = vsel %vm195, %v174, %v194
    %v197 = vsel %vm183, %v176, %v175
    %v198 = vsel %vm185, %v177, %v197
    %v199 = vsel %vm187, %v178, %v198
    %v200 = vsel %vm189, %v179, %v199
    %v201 = vsel %vm191, %v180, %v200
    %v202 = vsel %vm193, %v181, %v201
    %v203 = vsel %vm195, %v182, %v202
    %vm206 = vcmask 64512
    %v207 = vsel %vm206, %v196, -inf
    %208 = vmax.xlane.f32.xlu0 %v207
    %v209 = vpop.xlane.xlu0 %208
    %v210 = vsel %vm206, %v203, -inf
    %211 = vmax.xlane.f32.xlu0 %v210
    %v212 = vpop.xlane.xlu0 %211
    %v213 = vmax.f32 %v147, %v209
    %v214 = vmax.f32 %v148, %v212
    %v215 = vsub.f32 %v147, %v213
    %v216 = vsub.f32 %v148, %v214
    %v217 = vmul.f32 %v215, 1.442695
    %v218 = vpow.pop %v217
    %v219 = vmul.f32 %v216, 1.442695
    %v220 = vpow.pop %v219
    %222 = vset.pattern.permute.xlu0 0
    %223 = vperm.xlu0 %222, %v213
    %v224 = vpop.permute.xlu0 %223
    %226 = vset.pattern.permute.xlu0 0
    %227 = vperm.xlu0 %226, %v214
    %v228 = vpop.permute.xlu0 %227
    %v229 = vperm.slane %v224, 0
    %v230 = vperm.slane %v224, 1
    %v231 = vperm.slane %v224, 2
    %v232 = vperm.slane %v224, 3
    %v233 = vperm.slane %v224, 4
    %v234 = vperm.slane %v224, 5
    %v235 = vperm.slane %v224, 6
    %v236 = vperm.slane %v224, 7
    %v237 = vperm.slane %v228, 0
    %v238 = vperm.slane %v228, 1
    %v239 = vperm.slane %v228, 2
    %v240 = vperm.slane %v228, 3
    %v241 = vperm.slane %v228, 4
    %v242 = vperm.slane %v228, 5
    %v243 = vperm.slane %v228, 6
    %v244 = vperm.slane %v228, 7
    %v261 = vsub.f32 %v131, %v229
    %v262 = vsub.f32 %v132, %v230
    %v263 = vsub.f32 %v133, %v231
    %v264 = vsub.f32 %v134, %v232
    %v265 = vsub.f32 %v135, %v233
    %v266 = vsub.f32 %v136, %v234
    %v267 = vsub.f32 %v137, %v235
    %v268 = vsub.f32 %v138, %v236
    %v269 = vsub.f32 %v139, %v237
    %v270 = vsub.f32 %v140, %v238
    %v271 = vsub.f32 %v141, %v239
    %v272 = vsub.f32 %v142, %v240
    %v273 = vsub.f32 %v143, %v241
    %v274 = vsub.f32 %v144, %v242
    %v275 = vsub.f32 %v145, %v243
    %v276 = vsub.f32 %v146, %v244
    %v277 = vmul.f32 %v261, 1.442695
    %v278 = vpow.pop %v277
    %v279 = vmul.f32 %v262, 1.442695
    %v280 = vpow.pop %v279
    %v281 = vmul.f32 %v263, 1.442695
    %v282 = vpow.pop %v281
    %v283 = vmul.f32 %v264, 1.442695
    %v284 = vpow.pop %v283
    %v285 = vmul.f32 %v265, 1.442695
    %v286 = vpow.pop %v285
    %v287 = vmul.f32 %v266, 1.442695
    %v288 = vpow.pop %v287
    %v289 = vmul.f32 %v267, 1.442695
    %v290 = vpow.pop %v289
    %v291 = vmul.f32 %v268, 1.442695
    %v292 = vpow.pop %v291
    %v293 = vmul.f32 %v269, 1.442695
    %v294 = vpow.pop %v293
    %v295 = vmul.f32 %v270, 1.442695
    %v296 = vpow.pop %v295
    %v297 = vmul.f32 %v271, 1.442695
    %v298 = vpow.pop %v297
    %v299 = vmul.f32 %v272, 1.442695
    %v300 = vpow.pop %v299
    %v301 = vmul.f32 %v273, 1.442695
    %v302 = vpow.pop %v301
    %v303 = vmul.f32 %v274, 1.442695
    %v304 = vpow.pop %v303
    %v305 = vmul.f32 %v275, 1.442695
    %v306 = vpow.pop %v305
    %v307 = vmul.f32 %v276, 1.442695
    %v308 = vpow.pop %v307
    %v309 = vld [vmem:[#allocation3] sm:$0xff]
    %v310 = vld [vmem:[#allocation3 + $0x8] sm:$0xff]
    %v311 = vmul.f32 %v218, %v309
    %v312 = vmul.f32 %v220, %v310
    %329 = vset.pattern.permute.xlu0 0
    %330 = vperm.xlu0 %329, %v278
    %v331 = vpop.permute.xlu0 %330
    %332 = vset.pattern.permute.xlu0 0
    %333 = vperm.xlu0 %332, %v280
    %v334 = vpop.permute.xlu0 %333
    %335 = vset.pattern.permute.xlu0 0
    %336 = vperm.xlu0 %335, %v282
    %v337 = vpop.permute.xlu0 %336
    %338 = vset.pattern.permute.xlu0 0
    %339 = vperm.xlu0 %338, %v284
    %v340 = vpop.permute.xlu0 %339
    %341 = vset.pattern.permute.xlu0 0
    %342 = vperm.xlu0 %341, %v286
    %v343 = vpop.permute.xlu0 %342
    %344 = vset.pattern.permute.xlu0 0
    %345 = vperm.xlu0 %344, %v288
    %v346 = vpop.permute.xlu0 %345
    %347 = vset.pattern.permute.xlu0 0
    %348 = vperm.xlu0 %347, %v290
    %v349 = vpop.permute.xlu0 %348
    %350 = vset.pattern.permute.xlu0 0
    %351 = vperm.xlu0 %350, %v292
    %v352 = vpop.permute.xlu0 %351
    %353 = vset.pattern.permute.xlu0 0
    %354 = vperm.xlu0 %353, %v294
    %v355 = vpop.permute.xlu0 %354
    %356 = vset.pattern.permute.xlu0 0
    %357 = vperm.xlu0 %356, %v296
    %v358 = vpop.permute.xlu0 %357
    %359 = vset.pattern.permute.xlu0 0
    %360 = vperm.xlu0 %359, %v298
    %v361 = vpop.permute.xlu0 %360
    %362 = vset.pattern.permute.xlu0 0
    %363 = vperm.xlu0 %362, %v300
    %v364 = vpop.permute.xlu0 %363
    %365 = vset.pattern.permute.xlu0 0
    %366 = vperm.xlu0 %365, %v302
    %v367 = vpop.permute.xlu0 %366
    %368 = vset.pattern.permute.xlu0 0
    %369 = vperm.xlu0 %368, %v304
    %v370 = vpop.permute.xlu0 %369
    %371 = vset.pattern.permute.xlu0 0
    %372 = vperm.xlu0 %371, %v306
    %v373 = vpop.permute.xlu0 %372
    %374 = vset.pattern.permute.xlu0 0
    %375 = vperm.xlu0 %374, %v308
    %v376 = vpop.permute.xlu0 %375
    %v377 = vperm.slane %v331, %v166
    %v378 = vperm.slane %v334, %v166
    %v379 = vperm.slane %v337, %v166
    %v380 = vperm.slane %v340, %v166
    %v381 = vperm.slane %v343, %v166
    %v382 = vperm.slane %v346, %v166
    %v383 = vperm.slane %v349, %v166
    %v384 = vperm.slane %v352, %v166
    %v385 = vperm.slane %v355, %v166
    %v386 = vperm.slane %v358, %v166
    %v387 = vperm.slane %v361, %v166
    %v388 = vperm.slane %v364, %v166
    %v389 = vperm.slane %v367, %v166
    %v390 = vperm.slane %v370, %v166
    %v391 = vperm.slane %v373, %v166
    %v392 = vperm.slane %v376, %v166
    %v393 = vsel %vm183, %v378, %v377
    %v394 = vsel %vm185, %v379, %v393
    %v395 = vsel %vm187, %v380, %v394
    %v396 = vsel %vm189, %v381, %v395
    %v397 = vsel %vm191, %v382, %v396
    %v398 = vsel %vm193, %v383, %v397
    %v399 = vsel %vm195, %v384, %v398
    %v400 = vsel %vm183, %v386, %v385
    %v401 = vsel %vm185, %v387, %v400
    %v402 = vsel %vm187, %v388, %v401
    %v403 = vsel %vm189, %v389, %v402
    %v404 = vsel %vm191, %v390, %v403
    %v405 = vsel %vm193, %v391, %v404
    %v406 = vsel %vm195, %v392, %v405
    %v409 = vsel %vm206, %v399, 0.0
    %410 = vadd.xlane.f32.xlu0 %v409
    %v411 = vpop.xlane.xlu0 %410
    %v412 = vsel %vm206, %v406, 0.0
    %413 = vadd.xlane.f32.xlu0 %v412
    %v414 = vpop.xlane.xlu0 %413
    %v415 = vadd.f32 %v311, %v411
    %v416 = vadd.f32 %v312, %v414
    %vm417 = vcmask 7168
    %418 = vst.msk [vmem:[#allocation3] sm:$0xff] %vm417, %v415
    %419 = vst.msk [vmem:[#allocation3 + $0x8] sm:$0xff] %vm417, %v416
    %v436 = vmul.f32 %v331, %v44
    %v437 = vmul.f32 %v334, %v45
    %v438 = vmul.f32 %v337, %v46
    %v439 = vmul.f32 %v340, %v47
    %v440 = vmul.f32 %v343, %v48
    %v441 = vmul.f32 %v346, %v49
    %v442 = vmul.f32 %v349, %v50
    %v443 = vmul.f32 %v352, %v51
    %v444 = vmul.f32 %v355, %v52
    %v445 = vmul.f32 %v358, %v53
    %v446 = vmul.f32 %v361, %v54
    %v447 = vmul.f32 %v364, %v55
    %v448 = vmul.f32 %v367, %v56
    %v449 = vmul.f32 %v370, %v57
    %v450 = vmul.f32 %v373, %v58
    %v451 = vmul.f32 %v376, %v59
    %v452 = vsel %vm81, %v436, 0.0
    %v453 = vrot.slane %v452, 4
    %v454 = vadd.f32 %v452, %v453
    %v455 = vrot.slane %v454, 2
    %v456 = vadd.f32 %v454, %v455
    %v457 = vrot.slane %v456, 1
    %v458 = vadd.f32 %v456, %v457
    %v459 = vsel %vm81, %v437, 0.0
    %v460 = vrot.slane %v459, 4
    %v461 = vadd.f32 %v459, %v460
    %v462 = vrot.slane %v461, 2
    %v463 = vadd.f32 %v461, %v462
    %v464 = vrot.slane %v463, 1
    %v465 = vadd.f32 %v463, %v464
    %v466 = vsel %vm81, %v438, 0.0
    %v467 = vrot.slane %v466, 4
    %v468 = vadd.f32 %v466, %v467
    %v469 = vrot.slane %v468, 2
    %v470 = vadd.f32 %v468, %v469
    %v471 = vrot.slane %v470, 1
    %v472 = vadd.f32 %v470, %v471
    %v473 = vsel %vm81, %v439, 0.0
    %v474 = vrot.slane %v473, 4
    %v475 = vadd.f32 %v473, %v474
    %v476 = vrot.slane %v475, 2
    %v477 = vadd.f32 %v475, %v476
    %v478 = vrot.slane %v477, 1
    %v479 = vadd.f32 %v477, %v478
    %v480 = vsel %vm81, %v440, 0.0
    %v481 = vrot.slane %v480, 4
    %v482 = vadd.f32 %v480, %v481
    %v483 = vrot.slane %v482, 2
    %v484 = vadd.f32 %v482, %v483
    %v485 = vrot.slane %v484, 1
    %v486 = vadd.f32 %v484, %v485
    %v487 = vsel %vm81, %v441, 0.0
    %v488 = vrot.slane %v487, 4
    %v489 = vadd.f32 %v487, %v488
    %v490 = vrot.slane %v489, 2
    %v491 = vadd.f32 %v489, %v490
    %v492 = vrot.slane %v491, 1
    %v493 = vadd.f32 %v491, %v492
    %v494 = vsel %vm81, %v442, 0.0
    %v495 = vrot.slane %v494, 4
    %v496 = vadd.f32 %v494, %v495
    %v497 = vrot.slane %v496, 2
    %v498 = vadd.f32 %v496, %v497
    %v499 = vrot.slane %v498, 1
    %v500 = vadd.f32 %v498, %v499
    %v501 = vsel %vm81, %v443, 0.0
    %v502 = vrot.slane %v501, 4
    %v503 = vadd.f32 %v501, %v502
    %v504 = vrot.slane %v503, 2
    %v505 = vadd.f32 %v503, %v504
    %v506 = vrot.slane %v505, 1
    %v507 = vadd.f32 %v505, %v506
    %v508 = vsel %vm81, %v444, 0.0
    %v509 = vrot.slane %v508, 4
    %v510 = vadd.f32 %v508, %v509
    %v511 = vrot.slane %v510, 2
    %v512 = vadd.f32 %v510, %v511
    %v513 = vrot.slane %v512, 1
    %v514 = vadd.f32 %v512, %v513
    %v515 = vsel %vm81, %v445, 0.0
    %v516 = vrot.slane %v515, 4
    %v517 = vadd.f32 %v515, %v516
    %v518 = vrot.slane %v517, 2
    %v519 = vadd.f32 %v517, %v518
    %v520 = vrot.slane %v519, 1
    %v521 = vadd.f32 %v519, %v520
    %v522 = vsel %vm81, %v446, 0.0
    %v523 = vrot.slane %v522, 4
    %v524 = vadd.f32 %v522, %v523
    %v525 = vrot.slane %v524, 2
    %v526 = vadd.f32 %v524, %v525
    %v527 = vrot.slane %v526, 1
    %v528 = vadd.f32 %v526, %v527
    %v529 = vsel %vm81, %v447, 0.0
    %v530 = vrot.slane %v529, 4
    %v531 = vadd.f32 %v529, %v530
    %v532 = vrot.slane %v531, 2
    %v533 = vadd.f32 %v531, %v532
    %v534 = vrot.slane %v533, 1
    %v535 = vadd.f32 %v533, %v534
    %v536 = vsel %vm81, %v448, 0.0
    %v537 = vrot.slane %v536, 4
    %v538 = vadd.f32 %v536, %v537
    %v539 = vrot.slane %v538, 2
    %v540 = vadd.f32 %v538, %v539
    %v541 = vrot.slane %v540, 1
    %v542 = vadd.f32 %v540, %v541
    %v543 = vsel %vm81, %v449, 0.0
    %v544 = vrot.slane %v543, 4
    %v545 = vadd.f32 %v543, %v544
    %v546 = vrot.slane %v545, 2
    %v547 = vadd.f32 %v545, %v546
    %v548 = vrot.slane %v547, 1
    %v549 = vadd.f32 %v547, %v548
    %v550 = vsel %vm81, %v450, 0.0
    %v551 = vrot.slane %v550, 4
    %v552 = vadd.f32 %v550, %v551
    %v553 = vrot.slane %v552, 2
    %v554 = vadd.f32 %v552, %v553
    %v555 = vrot.slane %v554, 1
    %v556 = vadd.f32 %v554, %v555
    %v557 = vsel %vm81, %v451, 0.0
    %v558 = vrot.slane %v557, 4
    %v559 = vadd.f32 %v557, %v558
    %v560 = vrot.slane %v559, 2
    %v561 = vadd.f32 %v559, %v560
    %v562 = vrot.slane %v561, 1
    %v563 = vadd.f32 %v561, %v562
    %v564 = vld [vmem:[#allocation4] sm:$0xff]
    %v565 = vld [vmem:[#allocation4 + $0x8] sm:$0xff]
    %567 = vset.pattern.permute.xlu0 0
    %568 = vperm.xlu0 %567, %v218
    %v569 = vpop.permute.xlu0 %568
    %572 = vset.pattern.permute.xlu0 0
    %573 = vperm.xlu0 %572, %v220
    %v574 = vpop.permute.xlu0 %573
    %v576 = vmul.f32 %v569, %v564
    %v577 = vmul.f32 %v574, %v565
    %v594 = vsel %vm183, %v465, %v458
    %v595 = vsel %vm185, %v472, %v594
    %v596 = vsel %vm187, %v479, %v595
    %v597 = vsel %vm189, %v486, %v596
    %v598 = vsel %vm191, %v493, %v597
    %v599 = vsel %vm193, %v500, %v598
    %v600 = vsel %vm195, %v507, %v599
    %v601 = vsel %vm183, %v521, %v514
    %v602 = vsel %vm185, %v528, %v601
    %v603 = vsel %vm187, %v535, %v602
    %v604 = vsel %vm189, %v542, %v603
    %v605 = vsel %vm191, %v549, %v604
    %v606 = vsel %vm193, %v556, %v605
    %v607 = vsel %vm195, %v563, %v606
    %v610 = vadd.f32 %v576, %v600
    %v611 = vadd.f32 %v577, %v607
    %612 = vst.msk [vmem:[#allocation4] sm:$0xff] %vm81, %v610
    %613 = vst.msk [vmem:[#allocation4 + $0x8] sm:$0xff] %vm81, %v611
    %614 = vst.msk [vmem:[#allocation2] sm:$0xff] %vm417, %v213
    %615 = vst.msk [vmem:[#allocation2 + $0x8] sm:$0xff] %vm417, %v214
    // Predicated region
    $region22: #{tpu_custom_call.1} parent=1 // pred_check
      %p616 = pneg %p32
    $region23: #{tpu_custom_call.1} parent=1 // pred_check_branch
      %618 = sbr.rel (%p616) target = $region25
    $region24: #{tpu_custom_call.1} parent=1 // pred_region
      %v619 = vld [vmem:[#allocation3] sm:$0xff]
      %v620 = vld [vmem:[#allocation3 + $0x8] sm:$0xff]
      %v621 = vrcp.pop %v619
      %v622 = vrcp.pop %v620
      %v623 = vld [vmem:[#allocation4] sm:$0xff]
      %v624 = vld [vmem:[#allocation4 + $0x8] sm:$0xff]
      %626 = vset.pattern.permute.xlu0 0
      %627 = vperm.xlu0 %626, %v621
      %v628 = vpop.permute.xlu0 %627
      %631 = vset.pattern.permute.xlu0 0
      %632 = vperm.xlu0 %631, %v622
      %v633 = vpop.permute.xlu0 %632
      %v635 = vmul.f32 %v623, %v628
      %v636 = vmul.f32 %v624, %v633
      %637 = vst.msk [vmem:[#allocation9] sm:$0xff] %vm81, %v635
      %638 = vst.msk [vmem:[#allocation9 + $0x8] sm:$0xff] %vm81, %v636
    $region25: #{tpu_custom_call.1} parent=1 // pred_fallthru
      _
    // Predicated region
    $region26: #{tpu_custom_call.1} parent=1 // pred_check
      _
    $region27: #{tpu_custom_call.1} parent=1 // pred_check_branch
      %640 = sbr.rel (0) target = $region29
    $region28: #{tpu_custom_call.1} parent=1 // pred_region
      %642 = vsyncadd [#allocation8], 0
      %s643 = sshll.u32 [#allocation9], 4
      %s644 = int_to_ptr.vmem [resolvable:$true] %s643
      %s645 = sshll.u32 %s3, 4
      %s646 = int_to_ptr.hbm [resolvable:$true] %s645
      %651 = dma.vmem_to_hbm [thread:$0]  %s644, 256, %s646, [#allocation8], 128, 128, 8
    $region29: #{tpu_custom_call.1} parent=1 // pred_fallthru
      _
    // Predicated region
    $region30: #{tpu_custom_call.1} parent=1 // pred_check
      _
    $region31: #{tpu_custom_call.1} parent=1 // pred_check_branch
      %653 = sbr.rel (0) target = $region33
    $region32: #{tpu_custom_call.1} parent=1 // pred_region
      %655 = dma.done [#allocation8], 256
    $region33: #{tpu_custom_call.1} parent=1 // pred_fallthru
      _
    %656 = vsyncpa [#allocation7], 1
    %657 = vsyncpa [#allocation8], 1

</llo_original>
